<compile_context>
chip_gen: v5e
topology: v5e:2x2
jax: 0.10.0
libtpu: 0.0.40
codegen_flags: <defaults>
</compile_context>

<pallas_src>
import functools

import jax
import jax.numpy as jnp
from jax.experimental import pallas as pl
from jax.experimental.pallas import tpu as pltpu


def _round_up(v, m):
    return (v + m - 1) // m * m


def _gelu(y, approximate):
    if approximate:
        # tanh-GELU: the transcendental runs on the EUP slot (frees VALU bundles).
        c = jnp.float32(0.7978845608028654)  # sqrt(2/pi)
        return 0.5 * y * (1.0 + jnp.tanh(c * (y + jnp.float32(0.044715) * y * y * y)))
    # Exact erf GELU — PyTorch nn.GELU() default.
    inv_sqrt2 = jnp.float32(0.7071067811865476)
    return 0.5 * y * (1.0 + jax.lax.erf(y * inv_sqrt2))


def _single_pass_kernel(x_ref, w_ref, gamma_ref, beta_ref, o_ref, *,
                        eps, inv_n, approximate_gelu):
    """Whole (padded) batch resident: Linear + batch stats + BN + GELU in one step."""
    y = jnp.dot(x_ref[...], w_ref[...], preferred_element_type=jnp.float32)
    s = jnp.sum(y, axis=0, keepdims=True)             # zero-padded rows contribute 0
    sq = jnp.sum(y * y, axis=0, keepdims=True)
    mean = s * inv_n
    var = jnp.maximum(sq * inv_n - mean * mean, 0.0)   # biased var (training-mode BN)
    scale = gamma_ref[...] * jax.lax.rsqrt(var + eps)
    shift = beta_ref[...] - mean * scale
    o_ref[...] = _gelu(y * scale + shift, approximate_gelu).astype(o_ref.dtype)


def _two_pass_kernel(x_ref, w_ref, gamma_ref, beta_ref, o_ref,
                     sum_ref, sumsq_ref, ss_ref, *,
                     eps, inv_n, approximate_gelu, tm):
    """grid = (col_tiles, 2, batch_tiles); pass 0 = global stats, pass 1 = BN + GELU."""
    p = pl.program_id(1)   # 0: accumulate stats, 1: normalize + activate
    i = pl.program_id(2)   # batch tile index

    # Linear (bias folded away by BN); bf16/f32 operands, f32 accumulation on the MXU.
    y = jnp.dot(x_ref[...], w_ref[...], preferred_element_type=jnp.float32)

    @pl.when(jnp.logical_and(p == 0, i == 0))
    def _init_stats():
        sum_ref[...] = jnp.zeros_like(sum_ref)
        sumsq_ref[...] = jnp.zeros_like(sumsq_ref)

    @pl.when(p == 0)
    def _accumulate():
        # Sublane-partial accumulation: pure VPU adds per tile, no per-step cross-sublane
        # reduce and no masked 1-row stores.  Zero-padded batch rows contribute 0.
        y3 = y.reshape(tm // 8, 8, -1)
        sum_ref[...] += jnp.sum(y3, axis=0)
        sumsq_ref[...] += jnp.sum(y3 * y3, axis=0)

    @pl.when(jnp.logical_and(p == 1, i == 0))
    def _finalize_stats():
        s = jnp.sum(sum_ref[...], axis=0, keepdims=True)     # single 8->1 reduce
        sq = jnp.sum(sumsq_ref[...], axis=0, keepdims=True)
        mean = s * inv_n
        var = jnp.maximum(sq * inv_n - mean * mean, 0.0)
        scale = gamma_ref[...] * jax.lax.rsqrt(var + eps)
        ss_ref[0:1, :] = scale
        ss_ref[1:2, :] = beta_ref[...] - mean * scale

    @pl.when(p == 1)
    def _normalize_gelu():
        # BN folded into a single FMA per element, then GELU, lane-dense store.
        y_bn = y * ss_ref[0:1, :] + ss_ref[1:2, :]
        o_ref[...] = _gelu(y_bn, approximate_gelu).astype(o_ref.dtype)


def _vmem_capacity_bytes():
    try:
        return int(pltpu.get_tpu_info().vmem_capacity_bytes)
    except Exception:
        return 64 * 1024 * 1024   # conservative (fits every generation)


def mlp_layer(x, w, b, gamma, beta, *, eps=1e-5, tm_max=None, tn_max=512,
              use_bf16_matmul=True, approximate_gelu=False, out_dtype=jnp.float32):
    """Forward of MLPLayer with training-mode BatchNorm.

    x: [N, in_dim]; w: [out_dim, in_dim] (PyTorch layout); b/gamma/beta: [out_dim].
    """
    n, in_dim = x.shape
    out_dim = w.shape[0]
    del b  # exactly cancelled by training-mode BatchNorm (y - mean(y))

    vmem_cap = _vmem_capacity_bytes()
    vmem_limit = min(int(vmem_cap * 0.75), 100 * 1024 * 1024)
    if tm_max is None:
        # 128 MiB-VMEM parts (v5e/v6e) afford bigger batch tiles than v7x (64 MiB/TC).
        tm_max = 1024 if vmem_cap >= 128 * 1024 * 1024 else 512

    op_dtype = jnp.bfloat16 if use_bf16_matmul else jnp.float32

    # Column (out_dim) tiling: lane-dense multiples of 128.
    out_pad = _round_up(out_dim, 128)
    tn = min(_round_up(tn_max, 128), out_pad)
    out_pad = _round_up(out_pad, tn)
    num_col_tiles = out_pad // tn

    # Batch tiling (multiples of 16 for bf16 sublane packing).
    tm = min(_round_up(tm_max, 16), _round_up(n, 16))
    n_pad = _round_up(n, tm)
    num_batch_tiles = n_pad // tm

    # --- operand prep (copies are skipped when shapes already line up) ---------------
    x_op = x.astype(op_dtype)
    if n_pad != n:
        x_op = jnp.zeros((n_pad, in_dim), op_dtype).at[:n].set(x_op)
    w_op = w.T.astype(op_dtype)   # static weights: hoist this out of the step function
    g_op = gamma.astype(jnp.float32).reshape(1, out_dim)
    be_op = beta.astype(jnp.float32).reshape(1, out_dim)
    if out_pad != out_dim:
        w_op = jnp.zeros((in_dim, out_pad), op_dtype).at[:, :out_dim].set(w_op)
        g_op = jnp.zeros((1, out_pad), jnp.float32).at[:, :out_dim].set(g_op)
        be_op = jnp.zeros((1, out_pad), jnp.float32).at[:, :out_dim].set(be_op)

    common = dict(eps=float(eps), inv_n=1.0 / n, approximate_gelu=approximate_gelu)

    if num_batch_tiles == 1:
        # Single-pass path: one grid step per column tile.
        kernel = functools.partial(_single_pass_kernel, **common)
        grid_spec = pltpu.PrefetchScalarGridSpec(
            num_scalar_prefetch=0,
            grid=(num_col_tiles,),
            in_specs=[
                pl.BlockSpec((n_pad, in_dim), lambda j: (0, 0)),   # x (resident)
                pl.BlockSpec((in_dim, tn), lambda j: (0, j)),      # W column tile
                pl.BlockSpec((1, tn), lambda j: (0, j)),           # gamma
                pl.BlockSpec((1, tn), lambda j: (0, j)),           # beta
            ],
            out_specs=pl.BlockSpec((n_pad, tn), lambda j: (0, j)),
        )
        semantics = ("parallel",)
    else:
        # Two-pass path: pass 0 accumulates global per-column stats, pass 1 normalizes.
        kernel = functools.partial(_two_pass_kernel, tm=tm, **common)
        grid_spec = pltpu.PrefetchScalarGridSpec(
            num_scalar_prefetch=0,
            grid=(num_col_tiles, 2, num_batch_tiles),
            in_specs=[
                pl.BlockSpec((tm, in_dim), lambda j, p, i: (i, 0)),   # x batch tile
                pl.BlockSpec((in_dim, tn), lambda j, p, i: (0, j)),   # W column tile
                pl.BlockSpec((1, tn), lambda j, p, i: (0, j)),        # gamma
                pl.BlockSpec((1, tn), lambda j, p, i: (0, j)),        # beta
            ],
            # Pass 0 maps every step to block (0, j) -> no garbage writebacks; pass 1
            # streams the real lane-dense tiles out.
            out_specs=pl.BlockSpec((tm, tn), lambda j, p, i: (i * p, j)),
            scratch_shapes=[
                pltpu.VMEM((8, tn), jnp.float32),   # sublane-partial column sums
                pltpu.VMEM((8, tn), jnp.float32),   # sublane-partial sums of squares
                pltpu.VMEM((2, tn), jnp.float32),   # folded BN scale / shift
            ],
        )
        # Column tiles are fully independent -> "parallel" (megacore split on v7x);
        # the pass and batch axes share the stats scratch -> "arbitrary".
        semantics = ("parallel", "arbitrary", "arbitrary")

    out = pl.pallas_call(
        kernel,
        out_shape=jax.ShapeDtypeStruct((n_pad, out_pad), out_dtype),
        grid_spec=grid_spec,
        compiler_params=pltpu.CompilerParams(
            dimension_semantics=semantics,
            vmem_limit_bytes=vmem_limit,
        ),
    )(x_op, w_op, g_op, be_op)

    if n_pad != n or out_pad != out_dim:
        out = out[:n, :out_dim]
    return out


def _reference(x, w, b, gamma, beta, eps=1e-5):
    y = x @ w.T + b
    mean = jnp.mean(y, axis=0, keepdims=True)
    var = jnp.mean((y - mean) ** 2, axis=0, keepdims=True)
    y = (y - mean) * jax.lax.rsqrt(var + eps) * gamma[None, :] + beta[None, :]
    return jax.nn.gelu(y, approximate=False)


if __name__ == "__main__":
    key = jax.random.PRNGKey(0)

    def make_case(k, batch, in_dim, out_dim):
        kx, kw, kb, kg, kbe = jax.random.split(k, 5)
        bound = 1.0 / jnp.sqrt(jnp.float32(in_dim))
        w = jax.random.uniform(kw, (out_dim, in_dim), jnp.float32, -bound, bound)
        b = jax.random.uniform(kb, (out_dim,), jnp.float32, -bound, bound)
        gamma = jax.random.uniform(kg, (out_dim,), jnp.float32, 0.5, 1.5)
        beta = jax.random.uniform(kbe, (out_dim,), jnp.float32, -0.1, 0.1)
        x = jax.random.normal(kx, (batch, in_dim), jnp.float32)
        return x, w, b, gamma, beta

    def check(out, x, w, b, gamma, beta):
        # Reference with the same bf16 operand rounding the MXU sees (f32 accumulate).
        ref = _reference(x.astype(jnp.bfloat16).astype(jnp.float32),
                         w.astype(jnp.bfloat16).astype(jnp.float32),
                         b, gamma, beta)
        assert out.shape == ref.shape
        err = float(jnp.max(jnp.abs(out - ref)))
        assert jnp.allclose(out, ref, atol=2e-3, rtol=2e-3), f"mismatch, max err {err}"

    k1, k2 = jax.random.split(key)

    # Case 1: whole batch fits one tile -> single-pass kernel, one column tile.
    x, w, b, gamma, beta = make_case(k1, batch=40, in_dim=32, out_dim=16)
    out = jax.block_until_ready(mlp_layer(x, w, b, gamma, beta))
    check(out, x, w, b, gamma, beta)

    # Case 2: forced multi-tile path -> two-pass kernel, grid (2 col, 2 pass, 3 batch),
    # exercises the parallel out_dim axis, the stats scratch and the revisit trick.
    x, w, b, gamma, beta = make_case(k2, batch=40, in_dim=32, out_dim=160)
    out = jax.block_until_ready(
        mlp_layer(x, w, b, gamma, beta, tm_max=16, tn_max=128))
    check(out, x, w, b, gamma, beta)

    print("KERNEL_OK")
</pallas_src>

<mosaic_0001>
module attributes {stable_mosaic.version = 11 : i64} {
  func.func @_single_pass_kernel(%arg0: i32, %arg1: memref<48x32xbf16, #tpu.memory_space<vmem>>, %arg2: memref<32x128xbf16, #tpu.memory_space<vmem>>, %arg3: memref<1x128xf32, #tpu.memory_space<vmem>>, %arg4: memref<1x128xf32, #tpu.memory_space<vmem>>, %arg5: memref<48x128xf32, #tpu.memory_space<vmem>>) attributes {dimension_semantics = [#tpu.dimension_semantics<parallel>], iteration_bounds = array<i64: 1>, scalar_prefetch = 0 : i64, scratch_operands = 0 : i64, tpu.core_type = #tpu.core_type<tc>, window_params = [{pipeline_mode = #tpu.pipeline_mode<synchronous>, transform_indices = @transform_0, window_bounds = array<i64: 48, 32>}, {transform_indices = @transform_1, window_bounds = array<i64: 32, 128>}, {transform_indices = @transform_2, window_bounds = array<i64: 1, 128>}, {transform_indices = @transform_3, window_bounds = array<i64: 1, 128>}, {transform_indices = @transform_4, window_bounds = array<i64: 48, 128>}]} {
    %c0 = arith.constant 0 : index
    %c0_0 = arith.constant 0 : index
    %0 = vector.load %arg1[%c0, %c0_0] : memref<48x32xbf16, #tpu.memory_space<vmem>>, vector<48x32xbf16>
    %c0_1 = arith.constant 0 : index
    %c0_2 = arith.constant 0 : index
    %1 = vector.load %arg2[%c0_1, %c0_2] : memref<32x128xbf16, #tpu.memory_space<vmem>>, vector<32x128xbf16>
    %cst = arith.constant dense<0.000000e+00> : vector<48x128xf32>
    %2 = tpu.matmul %0, %1, %cst {dimension_numbers = #tpu.dot_dimension_numbers<[1], [0], [0], [1], [0, 0, 1, 1], [], []>} : vector<48x32xbf16>, vector<32x128xbf16>, vector<48x128xf32> -> vector<48x128xf32>
    %cst_3 = arith.constant dense<0.000000e+00> : vector<128xf32>
    %3 = vector.multi_reduction <add>, %2, %cst_3 [0] : vector<48x128xf32> to vector<128xf32>
    %4 = vector.shape_cast %3 : vector<128xf32> to vector<1x128xf32>
    %5 = arith.mulf %2, %2 : vector<48x128xf32>
    %cst_4 = arith.constant dense<0.000000e+00> : vector<128xf32>
    %6 = vector.multi_reduction <add>, %5, %cst_4 [0] : vector<48x128xf32> to vector<128xf32>
    %7 = vector.shape_cast %6 : vector<128xf32> to vector<1x128xf32>
    %cst_5 = arith.constant 2.500000e-02 : f32
    %8 = vector.broadcast %cst_5 : f32 to vector<1x128xf32>
    %9 = arith.mulf %4, %8 : vector<1x128xf32>
    %cst_6 = arith.constant 2.500000e-02 : f32
    %10 = vector.broadcast %cst_6 : f32 to vector<1x128xf32>
    %11 = arith.mulf %7, %10 : vector<1x128xf32>
    %12 = arith.mulf %9, %9 : vector<1x128xf32>
    %13 = arith.subf %11, %12 : vector<1x128xf32>
    %cst_7 = arith.constant 0.000000e+00 : f32
    %14 = vector.broadcast %cst_7 : f32 to vector<1x128xf32>
    %15 = arith.maximumf %13, %14 : vector<1x128xf32>
    %c0_8 = arith.constant 0 : index
    %c0_9 = arith.constant 0 : index
    %16 = vector.load %arg3[%c0_8, %c0_9] : memref<1x128xf32, #tpu.memory_space<vmem>>, vector<1x128xf32>
    %cst_10 = arith.constant 9.99999974E-6 : f32
    %17 = vector.broadcast %cst_10 : f32 to vector<1x128xf32>
    %18 = arith.addf %15, %17 : vector<1x128xf32>
    %19 = math.rsqrt %18 : vector<1x128xf32>
    %20 = arith.mulf %16, %19 : vector<1x128xf32>
    %c0_11 = arith.constant 0 : index
    %c0_12 = arith.constant 0 : index
    %21 = vector.load %arg4[%c0_11, %c0_12] : memref<1x128xf32, #tpu.memory_space<vmem>>, vector<1x128xf32>
    %22 = arith.mulf %9, %20 : vector<1x128xf32>
    %23 = arith.subf %21, %22 : vector<1x128xf32>
    %24 = vector.broadcast %20 : vector<1x128xf32> to vector<48x128xf32>
    %25 = arith.mulf %2, %24 : vector<48x128xf32>
    %26 = vector.broadcast %23 : vector<1x128xf32> to vector<48x128xf32>
    %27 = arith.addf %25, %26 : vector<48x128xf32>
    %cst_13 = arith.constant 5.000000e-01 : f32
    %28 = vector.broadcast %cst_13 : f32 to vector<48x128xf32>
    %29 = arith.mulf %28, %27 : vector<48x128xf32>
    %cst_14 = arith.constant 0.707106769 : f32
    %30 = vector.broadcast %cst_14 : f32 to vector<48x128xf32>
    %31 = arith.mulf %27, %30 : vector<48x128xf32>
    %32 = math.erf %31 : vector<48x128xf32>
    %cst_15 = arith.constant 1.000000e+00 : f32
    %33 = vector.broadcast %cst_15 : f32 to vector<48x128xf32>
    %34 = arith.addf %33, %32 : vector<48x128xf32>
    %35 = arith.mulf %29, %34 : vector<48x128xf32>
    %c0_16 = arith.constant 0 : index
    %c0_17 = arith.constant 0 : index
    %36 = vector.load %arg5[%c0_16, %c0_17] : memref<48x128xf32, #tpu.memory_space<vmem>>, vector<48x128xf32>
    tpu.vector_store %arg5[%c0_16, %c0_17], %35 {strides = array<i32>} : memref<48x128xf32, #tpu.memory_space<vmem>>, vector<48x128xf32>,
    return
  }
  func.func @transform_0(%arg0: i32) -> (i32, i32) {
    %c0_i32 = arith.constant 0 : i32
    %c0_i32_0 = arith.constant 0 : i32
    %c0_i32_1 = arith.constant 0 : i32
    return %c0_i32, %c0_i32_0 : i32, i32
  }
  func.func @transform_1(%arg0: i32) -> (i32, i32) {
    %c0_i32 = arith.constant 0 : i32
    %c0_i32_0 = arith.constant 0 : i32
    return %c0_i32, %arg0 : i32, i32
  }
  func.func @transform_2(%arg0: i32) -> (i32, i32) {
    %c0_i32 = arith.constant 0 : i32
    %c0_i32_0 = arith.constant 0 : i32
    return %c0_i32, %arg0 : i32, i32
  }
  func.func @transform_3(%arg0: i32) -> (i32, i32) {
    %c0_i32 = arith.constant 0 : i32
    %c0_i32_0 = arith.constant 0 : i32
    return %c0_i32, %arg0 : i32, i32
  }
  func.func @transform_4(%arg0: i32) -> (i32, i32) {
    %c0_i32 = arith.constant 0 : i32
    %c0_i32_0 = arith.constant 0 : i32
    return %c0_i32, %arg0 : i32, i32
  }
}

</mosaic_0001>

<llo_original>
// kernel: tpu_custom_call.1
$region0: #{tpu_custom_call.1}
  #allocation0 [shape = 'u32[]', space=smem, size = 0x4, offset = 0x4, fixed_abs, tag = 'smem constant byte address 0x4 - core index']
  #allocation1 [shape = 'u32[72,128]{1,0:T(1,128)}', space=vmem, size = 0x9000, scoped, tag = 'internal scratch']
  %s0 = inlined_call_operand.vmem [shape: bf16[48,32], index: 0, kind: input, shape index: {}]
  %s1 = inlined_call_operand.vmem [shape: bf16[32,128], index: 1, kind: input, shape index: {}]
  %s2 = inlined_call_operand.vmem [shape: f32[1,128], index: 2, kind: input, shape index: {}]
  %s3 = inlined_call_operand.vmem [shape: f32[1,128], index: 3, kind: input, shape index: {}]
  %s4 = inlined_call_operand.hbm [shape: f32[48,128], index: 4, kind: output, shape index: {}]
  %s5 = sld [smem:[#allocation0]]
  $region26: #{tpu_custom_call.1} parent=0
    _
  %s7 = ssub.s32 1, %s5
  %s8 = scalar_select 0, %s7, %s5
  $region1: #{tpu_custom_call.1} parent=0
    #allocation2 [shape = 'u8[24576]{0}', space=vmem, size = 0x6000, scoped, tag = 'output window, operand 0, single buffered']
    #allocation3 [shape = 's32[1]{0}', space=sflag, size = 0x4, scoped, tag = 'scoped memory for tpu_custom_call.1']
    %9 = vsyncpa [#allocation3], 0
    // Predicated region
    $region2: #{tpu_custom_call.1} parent=1 // pred_check
      _
    $region3: #{tpu_custom_call.1} parent=1 // pred_check_branch
      %11 = sbr.rel (0) target = $region5
    $region4: #{tpu_custom_call.1} parent=1 // pred_region
      _
    $region5: #{tpu_custom_call.1} parent=1 // pred_fallthru
      _
    // Predicated region
    $region6: #{tpu_custom_call.1} parent=1 // pred_check
      _
    $region7: #{tpu_custom_call.1} parent=1 // pred_check_branch
      %13 = sbr.rel (0) target = $region9
    $region8: #{tpu_custom_call.1} parent=1 // pred_region
      _
    $region9: #{tpu_custom_call.1} parent=1 // pred_fallthru
      _
    // Predicated region
    $region10: #{tpu_custom_call.1} parent=1 // pred_check
      _
    $region11: #{tpu_custom_call.1} parent=1 // pred_check_branch
      %15 = sbr.rel (0) target = $region13
    $region12: #{tpu_custom_call.1} parent=1 // pred_region
      _
    $region13: #{tpu_custom_call.1} parent=1 // pred_fallthru
      _
    // Predicated region
    $region14: #{tpu_custom_call.1} parent=1 // pred_check
      _
    $region15: #{tpu_custom_call.1} parent=1 // pred_check_branch
      %17 = sbr.rel (0) target = $region17
    $region16: #{tpu_custom_call.1} parent=1 // pred_region
      _
    $region17: #{tpu_custom_call.1} parent=1 // pred_fallthru
      _
    %v19 = vld [vmem:[%s0] sm:$0xf]
    %v20 = vld [vmem:[%s0 + $0x4] sm:$0xf]
    %v21 = vld [vmem:[%s0 + $0x8] sm:$0xf]
    %v22 = vld [vmem:[%s0 + $0xc] sm:$0xf]
    %v23 = vld [vmem:[%s0 + $0x10] sm:$0xf]
    %v24 = vld [vmem:[%s0 + $0x14] sm:$0xf]
    %v25 = vld [vmem:[%s1] sm:$0xf]
    %v26 = vld [vmem:[%s1 + $0x4] sm:$0xf]
    %v27 = vld [vmem:[%s1 + $0x8] sm:$0xf]
    %v28 = vld [vmem:[%s1 + $0xc] sm:$0xf]
    %v35 = vunpack.c.l.b16 %v19
    %v36 = vunpack.c.l.b16 %v20
    %v37 = vunpack.c.l.b16 %v21
    %v38 = vunpack.c.l.b16 %v22
    %v39 = vunpack.c.l.b16 %v23
    %v40 = vunpack.c.l.b16 %v24
    %v41 = vpack.c.b16 %v36, %v35
    %v42 = vpack.c.b16 %v38, %v37
    %v43 = vpack.c.b16 %v40, %v39
    %v48 = vunpack.c.l.b16 %v25
    %v49 = vunpack.c.l.b16 %v26
    %v50 = vunpack.c.l.b16 %v27
    %v51 = vunpack.c.l.b16 %v28
    %v52 = vpack.c.b16 %v49, %v48
    %v53 = vpack.c.b16 %v51, %v50
    %vm56 = vcmask 261120
    %v58 = vsel %vm56, %v41, 0
    %v61 = vsel %vm56, %v42, 0
    %v64 = vsel %vm56, %v43, 0
    %66 = vmatpush.bf16.msra.mxu0 0
    %67 = vmatpush.bf16.msra.mxu0 0
    %68 = vmatpush.bf16.msra.mxu0 0
    %69 = vmatpush.bf16.msra.mxu0 0
    %70 = vmatpush.bf16.msra.mxu0 0
    %71 = vmatpush.bf16.msra.mxu0 0
    %72 = vmatpush.bf16.msra.mxu0 %v53
    %73 = vmatpush.bf16.msra.mxu0 %v52
    %74 = vmatmul.bf16.gmra.mxu0 %v58
    %v75 = vpop.f32.mrf.mxu0
    %v76 = vadd.f32 0.0, %v75
    %v77 = vpop.f32.mrf.mxu0
    %v78 = vadd.f32 0.0, %v77
    %79 = vmatmul.bf16.gmra.mxu0 %v61
    %v80 = vpop.f32.mrf.mxu0
    %v81 = vadd.f32 0.0, %v80
    %v82 = vpop.f32.mrf.mxu0
    %v83 = vadd.f32 0.0, %v82
    %84 = vmatmul.bf16.gmra.mxu0 %v64
    %v85 = vpop.f32.mrf.mxu0
    %v86 = vadd.f32 0.0, %v85
    %v87 = vpop.f32.mrf.mxu0
    %v88 = vadd.f32 0.0, %v87
    %89 = vdwg.mxu0
    %v90 = vadd.f32 %v76, %v78
    %v91 = vadd.f32 %v90, %v81
    %v92 = vadd.f32 %v91, %v83
    %v93 = vadd.f32 %v92, %v86
    %v94 = vadd.f32 %v93, %v88
    %v95 = vrot.slane %v94, 4
    %v96 = vadd.f32 %v94, %v95
    %v97 = vrot.slane %v96, 2
    %v98 = vadd.f32 %v96, %v97
    %v99 = vrot.slane %v98, 1
    %v100 = vadd.f32 %v98, %v99
    %v101 = vmul.f32 %v76, %v76
    %v102 = vmul.f32 %v78, %v78
    %v103 = vmul.f32 %v81, %v81
    %v104 = vmul.f32 %v83, %v83
    %v105 = vmul.f32 %v86, %v86
    %v106 = vmul.f32 %v88, %v88
    %v107 = vadd.f32 %v101, %v102
    %v108 = vadd.f32 %v107, %v103
    %v109 = vadd.f32 %v108, %v104
    %v110 = vadd.f32 %v109, %v105
    %v111 = vadd.f32 %v110, %v106
    %v112 = vrot.slane %v111, 4
    %v113 = vadd.f32 %v111, %v112
    %v114 = vrot.slane %v113, 2
    %v115 = vadd.f32 %v113, %v114
    %v116 = vrot.slane %v115, 1
    %v117 = vadd.f32 %v115, %v116
    %v118 = vmul.f32 %v100, 0.025
    %v119 = vmul.f32 %v117, 0.025
    %v120 = vmul.f32 %v118, %v118
    %v121 = vsub.f32 %v119, %v120
    %v122 = vmax.f32 %v121, 0.0
    %v123 = vld [vmem:[%s2] sm:$0x1]
    %v124 = vadd.f32 %v122, 1e-05
    %v125 = vrsqrt.pop %v124
    %v126 = vmul.f32 %v125, %v124
    %v127 = vmul.f32 %v126, %v125
    %v128 = vmul.f32 0.5, %v127
    %v129 = vsub.f32 1.5, %v128
    %v130 = vmul.f32 %v125, %v129
    %vm131 = vweird.f32 %v124
    %vm132 = vweird.f32 %v125
    %vm133 = vmor %vm131, %vm132
    %v134 = vsel %vm133, %v125, %v130
    %v135 = vmul.f32 %v123, %v134
    %v136 = vld [vmem:[%s3] sm:$0x1]
    %v137 = vmul.f32 %v118, %v135
    %v138 = vsub.f32 %v136, %v137
    %v140 = vperm.slane %v135, 0
    %v142 = vmul.f32 %v76, %v140
    %v143 = vmul.f32 %v78, %v140
    %v144 = vmul.f32 %v81, %v140
    %v145 = vmul.f32 %v83, %v140
    %v146 = vmul.f32 %v86, %v140
    %v147 = vmul.f32 %v88, %v140
    %v149 = vperm.slane %v138, 0
    %v151 = vadd.f32 %v142, %v149
    %v152 = vadd.f32 %v143, %v149
    %v153 = vadd.f32 %v144, %v149
    %v154 = vadd.f32 %v145, %v149
    %v155 = vadd.f32 %v146, %v149
    %v156 = vadd.f32 %v147, %v149
    %v157 = vmul.f32 %v151, 0.5
    %v158 = vmul.f32 %v152, 0.5
    %v159 = vmul.f32 %v153, 0.5
    %v160 = vmul.f32 %v154, 0.5
    %v161 = vmul.f32 %v155, 0.5
    %v162 = vmul.f32 %v156, 0.5
    %v163 = vmul.f32 %v151, 0.70710677
    %v164 = vmul.f32 %v152, 0.70710677
    %v165 = vmul.f32 %v153, 0.70710677
    %v166 = vmul.f32 %v154, 0.70710677
    %v167 = vmul.f32 %v155, 0.70710677
    %v168 = vmul.f32 %v156, 0.70710677
    %v169 = vmul.f32 %v163, %v163
    %v170 = vmin.f32 16.0, %v169
    %v171 = vmul.f32 %v170, 2.1237322e-06
    %v172 = vadd.f32 %v171, 0.00028619796
    %v173 = vmul.f32 %v170, %v172
    %v174 = vadd.f32 %v173, 0.0036580483
    %v175 = vmul.f32 %v170, %v174
    %v176 = vadd.f32 %v175, 0.05243302
    %v177 = vmul.f32 %v170, %v176
    %v178 = vadd.f32 %v177, 0.18741608
    %v179 = vmul.f32 %v170, %v178
    %v180 = vadd.f32 %v179, 1.1283791
    %v181 = vmul.f32 %v163, %v180
    %v182 = vmul.f32 %v170, 3.8918573e-05
    %v183 = vadd.f32 %v182, 0.001143296
    %v184 = vmul.f32 %v170, %v183
    %v185 = vadd.f32 %v184, 0.014752088
    %v186 = vmul.f32 %v170, %v185
    %v187 = vadd.f32 %v186, 0.112945676
    %v188 = vmul.f32 %v170, %v187
    %v189 = vadd.f32 %v188, 0.4994258
    %v190 = vmul.f32 %v170, %v189
    %v191 = vadd.f32 %v190, 1.0
    %v192 = vrcp.pop %v191
    %v193 = vmul.f32 %v191, %v192
    %v194 = vsub.f32 1.0, %v193
    %v195 = vmul.f32 %v192, %v194
    %v196 = vadd.f32 %v192, %v195
    %vm197 = vweird.f32 %v191
    %vm198 = vweird.f32 %v192
    %vm199 = vmor %vm197, %vm198
    %v200 = vsel %vm199, %v192, %v196
    %v201 = vand.u32 2147483647, %v191
    %vm202 = vcmp.eq.f32.partialorder %v201, 8.507059e+37
    %v203 = vand.u32 %v191, 2147483648
    %v204 = vor.u32 1.1754944e-38, %v203
    %v205 = vsel %vm202, %v204, %v200
    %v206 = vmul.f32 %v181, %v205
    %v207 = vmin.f32 %v206, 1.0
    %v208 = vmax.f32 %v207, -1.0
    %v209 = vmul.f32 %v164, %v164
    %v210 = vmin.f32 16.0, %v209
    %v211 = vmul.f32 %v210, 2.1237322e-06
    %v212 = vadd.f32 %v211, 0.00028619796
    %v213 = vmul.f32 %v210, %v212
    %v214 = vadd.f32 %v213, 0.0036580483
    %v215 = vmul.f32 %v210, %v214
    %v216 = vadd.f32 %v215, 0.05243302
    %v217 = vmul.f32 %v210, %v216
    %v218 = vadd.f32 %v217, 0.18741608
    %v219 = vmul.f32 %v210, %v218
    %v220 = vadd.f32 %v219, 1.1283791
    %v221 = vmul.f32 %v164, %v220
    %v222 = vmul.f32 %v210, 3.8918573e-05
    %v223 = vadd.f32 %v222, 0.001143296
    %v224 = vmul.f32 %v210, %v223
    %v225 = vadd.f32 %v224, 0.014752088
    %v226 = vmul.f32 %v210, %v225
    %v227 = vadd.f32 %v226, 0.112945676
    %v228 = vmul.f32 %v210, %v227
    %v229 = vadd.f32 %v228, 0.4994258
    %v230 = vmul.f32 %v210, %v229
    %v231 = vadd.f32 %v230, 1.0
    %v232 = vrcp.pop %v231
    %v233 = vmul.f32 %v231, %v232
    %v234 = vsub.f32 1.0, %v233
    %v235 = vmul.f32 %v232, %v234
    %v236 = vadd.f32 %v232, %v235
    %vm237 = vweird.f32 %v231
    %vm238 = vweird.f32 %v232
    %vm239 = vmor %vm237, %vm238
    %v240 = vsel %vm239, %v232, %v236
    %v241 = vand.u32 2147483647, %v231
    %vm242 = vcmp.eq.f32.partialorder %v241, 8.507059e+37
    %v243 = vand.u32 %v231, 2147483648
    %v244 = vor.u32 1.1754944e-38, %v243
    %v245 = vsel %vm242, %v244, %v240
    %v246 = vmul.f32 %v221, %v245
    %v247 = vmin.f32 %v246, 1.0
    %v248 = vmax.f32 %v247, -1.0
    %v249 = vmul.f32 %v165, %v165
    %v250 = vmin.f32 16.0, %v249
    %v251 = vmul.f32 %v250, 2.1237322e-06
    %v252 = vadd.f32 %v251, 0.00028619796
    %v253 = vmul.f32 %v250, %v252
    %v254 = vadd.f32 %v253, 0.0036580483
    %v255 = vmul.f32 %v250, %v254
    %v256 = vadd.f32 %v255, 0.05243302
    %v257 = vmul.f32 %v250, %v256
    %v258 = vadd.f32 %v257, 0.18741608
    %v259 = vmul.f32 %v250, %v258
    %v260 = vadd.f32 %v259, 1.1283791
    %v261 = vmul.f32 %v165, %v260
    %v262 = vmul.f32 %v250, 3.8918573e-05
    %v263 = vadd.f32 %v262, 0.001143296
    %v264 = vmul.f32 %v250, %v263
    %v265 = vadd.f32 %v264, 0.014752088
    %v266 = vmul.f32 %v250, %v265
    %v267 = vadd.f32 %v266, 0.112945676
    %v268 = vmul.f32 %v250, %v267
    %v269 = vadd.f32 %v268, 0.4994258
    %v270 = vmul.f32 %v250, %v269
    %v271 = vadd.f32 %v270, 1.0
    %v272 = vrcp.pop %v271
    %v273 = vmul.f32 %v271, %v272
    %v274 = vsub.f32 1.0, %v273
    %v275 = vmul.f32 %v272, %v274
    %v276 = vadd.f32 %v272, %v275
    %vm277 = vweird.f32 %v271
    %vm278 = vweird.f32 %v272
    %vm279 = vmor %vm277, %vm278
    %v280 = vsel %vm279, %v272, %v276
    %v281 = vand.u32 2147483647, %v271
    %vm282 = vcmp.eq.f32.partialorder %v281, 8.507059e+37
    %v283 = vand.u32 %v271, 2147483648
    %v284 = vor.u32 1.1754944e-38, %v283
    %v285 = vsel %vm282, %v284, %v280
    %v286 = vmul.f32 %v261, %v285
    %v287 = vmin.f32 %v286, 1.0
    %v288 = vmax.f32 %v287, -1.0
    %v289 = vmul.f32 %v166, %v166
    %v290 = vmin.f32 16.0, %v289
    %v291 = vmul.f32 %v290, 2.1237322e-06
    %v292 = vadd.f32 %v291, 0.00028619796
    %v293 = vmul.f32 %v290, %v292
    %v294 = vadd.f32 %v293, 0.0036580483
    %v295 = vmul.f32 %v290, %v294
    %v296 = vadd.f32 %v295, 0.05243302
    %v297 = vmul.f32 %v290, %v296
    %v298 = vadd.f32 %v297, 0.18741608
    %v299 = vmul.f32 %v290, %v298
    %v300 = vadd.f32 %v299, 1.1283791
    %v301 = vmul.f32 %v166, %v300
    %v302 = vmul.f32 %v290, 3.8918573e-05
    %v303 = vadd.f32 %v302, 0.001143296
    %v304 = vmul.f32 %v290, %v303
    %v305 = vadd.f32 %v304, 0.014752088
    %v306 = vmul.f32 %v290, %v305
    %v307 = vadd.f32 %v306, 0.112945676
    %v308 = vmul.f32 %v290, %v307
    %v309 = vadd.f32 %v308, 0.4994258
    %v310 = vmul.f32 %v290, %v309
    %v311 = vadd.f32 %v310, 1.0
    %v312 = vrcp.pop %v311
    %v313 = vmul.f32 %v311, %v312
    %v314 = vsub.f32 1.0, %v313
    %v315 = vmul.f32 %v312, %v314
    %v316 = vadd.f32 %v312, %v315
    %vm317 = vweird.f32 %v311
    %vm318 = vweird.f32 %v312
    %vm319 = vmor %vm317, %vm318
    %v320 = vsel %vm319, %v312, %v316
    %v321 = vand.u32 2147483647, %v311
    %vm322 = vcmp.eq.f32.partialorder %v321, 8.507059e+37
    %v323 = vand.u32 %v311, 2147483648
    %v324 = vor.u32 1.1754944e-38, %v323
    %v325 = vsel %vm322, %v324, %v320
    %v326 = vmul.f32 %v301, %v325
    %v327 = vmin.f32 %v326, 1.0
    %v328 = vmax.f32 %v327, -1.0
    %v329 = vmul.f32 %v167, %v167
    %v330 = vmin.f32 16.0, %v329
    %v331 = vmul.f32 %v330, 2.1237322e-06
    %v332 = vadd.f32 %v331, 0.00028619796
    %v333 = vmul.f32 %v330, %v332
    %v334 = vadd.f32 %v333, 0.0036580483
    %v335 = vmul.f32 %v330, %v334
    %v336 = vadd.f32 %v335, 0.05243302
    %v337 = vmul.f32 %v330, %v336
    %v338 = vadd.f32 %v337, 0.18741608
    %v339 = vmul.f32 %v330, %v338
    %v340 = vadd.f32 %v339, 1.1283791
    %v341 = vmul.f32 %v167, %v340
    %v342 = vmul.f32 %v330, 3.8918573e-05
    %v343 = vadd.f32 %v342, 0.001143296
    %v344 = vmul.f32 %v330, %v343
    %v345 = vadd.f32 %v344, 0.014752088
    %v346 = vmul.f32 %v330, %v345
    %v347 = vadd.f32 %v346, 0.112945676
    %v348 = vmul.f32 %v330, %v347
    %v349 = vadd.f32 %v348, 0.4994258
    %v350 = vmul.f32 %v330, %v349
    %v351 = vadd.f32 %v350, 1.0
    %v352 = vrcp.pop %v351
    %v353 = vmul.f32 %v351, %v352
    %v354 = vsub.f32 1.0, %v353
    %v355 = vmul.f32 %v352, %v354
    %v356 = vadd.f32 %v352, %v355
    %vm357 = vweird.f32 %v351
    %vm358 = vweird.f32 %v352
    %vm359 = vmor %vm357, %vm358
    %v360 = vsel %vm359, %v352, %v356
    %v361 = vand.u32 2147483647, %v351
    %vm362 = vcmp.eq.f32.partialorder %v361, 8.507059e+37
    %v363 = vand.u32 %v351, 2147483648
    %v364 = vor.u32 1.1754944e-38, %v363
    %v365 = vsel %vm362, %v364, %v360
    %v366 = vmul.f32 %v341, %v365
    %v367 = vmin.f32 %v366, 1.0
    %v368 = vmax.f32 %v367, -1.0
    %v369 = vmul.f32 %v168, %v168
    %v370 = vmin.f32 16.0, %v369
    %v371 = vmul.f32 %v370, 2.1237322e-06
    %v372 = vadd.f32 %v371, 0.00028619796
    %v373 = vmul.f32 %v370, %v372
    %v374 = vadd.f32 %v373, 0.0036580483
    %v375 = vmul.f32 %v370, %v374
    %v376 = vadd.f32 %v375, 0.05243302
    %v377 = vmul.f32 %v370, %v376
    %v378 = vadd.f32 %v377, 0.18741608
    %v379 = vmul.f32 %v370, %v378
    %v380 = vadd.f32 %v379, 1.1283791
    %v381 = vmul.f32 %v168, %v380
    %v382 = vmul.f32 %v370, 3.8918573e-05
    %v383 = vadd.f32 %v382, 0.001143296
    %v384 = vmul.f32 %v370, %v383
    %v385 = vadd.f32 %v384, 0.014752088
    %v386 = vmul.f32 %v370, %v385
    %v387 = vadd.f32 %v386, 0.112945676
    %v388 = vmul.f32 %v370, %v387
    %v389 = vadd.f32 %v388, 0.4994258
    %v390 = vmul.f32 %v370, %v389
    %v391 = vadd.f32 %v390, 1.0
    %v392 = vrcp.pop %v391
    %v393 = vmul.f32 %v391, %v392
    %v394 = vsub.f32 1.0, %v393
    %v395 = vmul.f32 %v392, %v394
    %v396 = vadd.f32 %v392, %v395
    %vm397 = vweird.f32 %v391
    %vm398 = vweird.f32 %v392
    %vm399 = vmor %vm397, %vm398
    %v400 = vsel %vm399, %v392, %v396
    %v401 = vand.u32 2147483647, %v391
    %vm402 = vcmp.eq.f32.partialorder %v401, 8.507059e+37
    %v403 = vand.u32 %v391, 2147483648
    %v404 = vor.u32 1.1754944e-38, %v403
    %v405 = vsel %vm402, %v404, %v400
    %v406 = vmul.f32 %v381, %v405
    %v407 = vmin.f32 %v406, 1.0
    %v408 = vmax.f32 %v407, -1.0
    %v409 = vadd.f32 %v208, 1.0
    %v410 = vadd.f32 %v248, 1.0
    %v411 = vadd.f32 %v288, 1.0
    %v412 = vadd.f32 %v328, 1.0
    %v413 = vadd.f32 %v368, 1.0
    %v414 = vadd.f32 %v408, 1.0
    %v415 = vmul.f32 %v157, %v409
    %v416 = vmul.f32 %v158, %v410
    %v417 = vmul.f32 %v159, %v411
    %v418 = vmul.f32 %v160, %v412
    %v419 = vmul.f32 %v161, %v413
    %v420 = vmul.f32 %v162, %v414
    %421 = vst [vmem:[#allocation2] sm:$0xff] %v415
    %422 = vst [vmem:[#allocation2 + $0x8] sm:$0xff] %v416
    %423 = vst [vmem:[#allocation2 + $0x10] sm:$0xff] %v417
    %424 = vst [vmem:[#allocation2 + $0x18] sm:$0xff] %v418
    %425 = vst [vmem:[#allocation2 + $0x20] sm:$0xff] %v419
    %426 = vst [vmem:[#allocation2 + $0x28] sm:$0xff] %v420
    // Predicated region
    $region18: #{tpu_custom_call.1} parent=1 // pred_check
      _
    $region19: #{tpu_custom_call.1} parent=1 // pred_check_branch
      %428 = sbr.rel (0) target = $region21
    $region20: #{tpu_custom_call.1} parent=1 // pred_region
      %430 = vsyncadd [#allocation3], 0
      %s431 = sshll.u32 [#allocation2], 4
      %s432 = int_to_ptr.vmem [resolvable:$true] %s431
      %s433 = sshll.u32 %s4, 4
      %s434 = int_to_ptr.hbm [resolvable:$true] %s433
      %439 = dma.vmem_to_hbm [thread:$0]  %s432, 768, %s434, [#allocation3], 128, 128, 8
    $region21: #{tpu_custom_call.1} parent=1 // pred_fallthru
      _
    // Predicated region
    $region22: #{tpu_custom_call.1} parent=1 // pred_check
      _
    $region23: #{tpu_custom_call.1} parent=1 // pred_check_branch
      %441 = sbr.rel (0) target = $region25
    $region24: #{tpu_custom_call.1} parent=1 // pred_region
      %443 = dma.done [#allocation3], 768
    $region25: #{tpu_custom_call.1} parent=1 // pred_fallthru
      _
    %444 = vsyncpa [#allocation3], 1

</llo_original>
